<compile_context>
chip_gen: v7x
topology: tpu7x:2x2x1
jax: 0.10.0
libtpu: 0.0.40
codegen_flags: <defaults>
</compile_context>

<pallas_src>
import jax
import jax.numpy as jnp
from jax.experimental import pallas as pl
from jax.experimental.pallas import tpu as pltpu


def _round_up(x, m):
    return ((x + m - 1) // m) * m


def _make_pool_kernel(n_points, tn, idx_resident, ragged):
    """Build the kernel body with static params baked in.

    Refs:
      idx_ref : int32   (num_n, tn) resident idx  OR  (1, tn) streamed idx block
      inv_ref : float32 (b_pad, 1)  exact 1/count (NaN for empty batches)
      feat_ref: native  (tn, tc)    feature block
      out_ref : float32 (b_pad, tc) output block == f32 accumulator (resident over N)
    """

    def kernel(idx_ref, inv_ref, feat_ref, out_ref):
        ni = pl.program_id(1)

        @pl.when(ni == 0)
        def _init():
            out_ref[...] = jnp.zeros_like(out_ref)

        feat = feat_ref[...]                                    # (tn, tc), native dtype
        if ragged:
            # The last N block is partial: its out-of-bounds rows hold garbage which
            # would poison the accumulator through 0 * NaN/Inf in the matmul.  Zero them.
            rows = jax.lax.broadcasted_iota(jnp.int32, (feat.shape[0], 1), 0)
            feat = jnp.where(rows + ni * tn < n_points, feat, jnp.zeros_like(feat))

        if idx_resident:
            idx = idx_ref[pl.ds(ni, 1), :]                      # (1, tn) slice of resident idx
        else:
            idx = idx_ref[...]                                  # (1, tn) streamed block

        b_pad = out_ref.shape[0]
        batch_ids = jax.lax.broadcasted_iota(jnp.int32, (b_pad, idx.shape[-1]), 0)
        # One-hot segment mask in the feature dtype (padded rows carry idx = -1).
        mask = (batch_ids == idx).astype(feat.dtype)            # (b_pad, tn)

        # Segment sums on the MXU; f32 accumulation directly into the resident out block.
        out_ref[...] += jnp.dot(mask, feat, preferred_element_type=jnp.float32)

        @pl.when(ni == pl.num_programs(1) - 1)
        def _finalize():
            # Exact 1/count came from the wrapper (NaN for empty batches -> torch's
            # mean-of-empty semantics is preserved through sigmoid(NaN)).
            out_ref[...] = jax.nn.sigmoid(out_ref[...] * inv_ref[...]).astype(out_ref.dtype)

    return kernel


def global_mean_attention_pooling(features, point_idx, num_batches, *, tn=2048, tc=512):
    """features: (N, C); point_idx: (N,) int; returns (num_batches, C) float32."""
    n, c = features.shape
    num_batches = int(num_batches)
    itemsize = jnp.dtype(features.dtype).itemsize

    b_pad = _round_up(max(num_batches, 1), 8)            # sublane-aligned output rows

    # ---- C tiling: lane-dense blocks; keep >=2 C tiles when possible (v7x megacore). --
    if c >= 128:
        tc_eff = min(max(128, _round_up(tc, 128)), _round_up(c, 128))
        half = _round_up(pl.cdiv(c, 2), 128)
        if half < tc_eff and pl.cdiv(c, half) >= 2:
            tc_eff = half
    else:
        tc_eff = c                                        # full-dim block (exempt from 128 rule)
    num_c = pl.cdiv(c, tc_eff)

    # ---- N tiling: target ~2-4 MiB feature blocks to amortize per-step overhead. ------
    tn_goal = max(128, _round_up(tn, 128))
    if tn_goal * tc_eff * itemsize < (2 << 20):
        tn_goal = min(4096, max(tn_goal,
                                _round_up((2 << 20) // max(tc_eff * itemsize, 1), 128)))
    # Bound the (b_pad, tn) one-hot mask so large-B workloads do not go spill-bound.
    if b_pad * tn_goal * 4 > (1 << 20):
        tn_goal = max(512, _round_up((1 << 20) // (b_pad * 4), 128))
    tn_eff = min(tn_goal, _round_up(n, 128))
    num_n = pl.cdiv(n, tn_eff)
    n_pad = num_n * tn_eff
    ragged = (n % tn_eff) != 0                            # last N block has garbage rows

    # ---- idx: tiny 1-D pad with -1 (matches no batch row); resident in VMEM if small. -
    idx = jnp.asarray(point_idx, jnp.int32)
    idx_padded = jnp.pad(idx, (0, n_pad - n), constant_values=-1)
    idx_resident = (n_pad * 4) <= (2 << 20)
    if idx_resident:
        idx_arr = idx_padded.reshape(num_n, tn_eff)
        idx_spec = pl.BlockSpec((num_n, tn_eff), lambda ci, ni: (0, 0))   # DMA'd once
    else:
        idx_arr = idx_padded.reshape(1, n_pad)
        idx_spec = pl.BlockSpec((1, tn_eff), lambda ci, ni: (0, ni))      # streamed

    # ---- Per-batch counts -> exact reciprocal (empty batch -> NaN, torch semantics). --
    cnt = jnp.zeros((b_pad,), jnp.float32).at[idx].add(1.0)
    inv_cnt = jnp.where(cnt > 0, 1.0 / cnt, jnp.nan).astype(jnp.float32).reshape(b_pad, 1)

    # ---- VMEM budget / compiler params (double-buffered feature block dominates). -----
    feat_block_bytes = tn_eff * tc_eff * itemsize
    idx_bytes = n_pad * 4 if idx_resident else tn_eff * 4
    out_block_bytes = b_pad * tc_eff * 4
    vmem_need = 2 * feat_block_bytes + 2 * idx_bytes + 2 * out_block_bytes + b_pad * 4
    vmem_limit = int(min(max(int(vmem_need * 1.5) + (1 << 20), 16 << 20), 32 << 20))

    cost = pl.CostEstimate(
        flops=2 * b_pad * n * c,
        transcendentals=b_pad * c,
        bytes_accessed=(n * c * itemsize
                        + (1 if idx_resident else num_c) * n_pad * 4
                        + b_pad * c * 4 + b_pad * 4),
    )

    kernel = _make_pool_kernel(n, tn_eff, idx_resident, ragged)

    out = pl.pallas_call(
        kernel,
        out_shape=jax.ShapeDtypeStruct((b_pad, c), jnp.float32),
        grid_spec=pltpu.PrefetchScalarGridSpec(
            num_scalar_prefetch=0,
            grid=(num_c, num_n),  # C tiles (parallel), N reduction innermost (arbitrary)
            in_specs=[
                idx_spec,
                pl.BlockSpec((b_pad, 1), lambda ci, ni: (0, 0)),
                pl.BlockSpec((tn_eff, tc_eff), lambda ci, ni: (ni, ci)),
            ],
            out_specs=pl.BlockSpec((b_pad, tc_eff), lambda ci, ni: (0, ci)),
        ),
        compiler_params=pltpu.CompilerParams(
            dimension_semantics=("parallel", "arbitrary"),
            vmem_limit_bytes=vmem_limit,
        ),
        cost_estimate=cost,
    )(idx_arr, inv_cnt, features)

    return out[:num_batches, :]


if __name__ == "__main__":
    key = jax.random.PRNGKey(0)
    k_feat, k_idx = jax.random.split(key)

    N = 100   # number of active (sparse) points (not tile-aligned -> exercises ragged path)
    C = 32    # feature channels ("dimension")
    B = 3     # number of batch samples (max_idx + 1)

    features = jax.random.normal(k_feat, (N, C), dtype=jnp.float32)
    point_idx = jax.random.randint(k_idx, (N,), 0, B, dtype=jnp.int32)
    # Make sure every batch id occurs at least once (so max_idx + 1 == B, as in torch).
    point_idx = point_idx.at[:B].set(jnp.arange(B, dtype=jnp.int32))

    out = jax.block_until_ready(global_mean_attention_pooling(features, point_idx, B))

    # Pure-JAX reference (segment mean + sigmoid), mirroring the torch forward.
    ref = jnp.stack(
        [
            jax.nn.sigmoid(
                jnp.sum(jnp.where((point_idx == i)[:, None], features, 0.0), axis=0)
                / jnp.sum(point_idx == i)
            )
            for i in range(B)
        ]
    )

    assert out.shape == (B, C), out.shape
    err = float(jnp.max(jnp.abs(out - ref)))
    assert jnp.allclose(out, ref, atol=1e-5, rtol=1e-5), err

    print("KERNEL_OK")
</pallas_src>

<mosaic_0001>
module attributes {stable_mosaic.version = 11 : i64} {
  func.func @kernel(%arg0: i32, %arg1: i32, %arg2: memref<1x128xi32, #tpu.memory_space<vmem>>, %arg3: memref<8x1xf32, #tpu.memory_space<vmem>>, %arg4: memref<128x32xf32, #tpu.memory_space<vmem>>, %arg5: memref<8x32xf32, #tpu.memory_space<vmem>>) attributes {dimension_semantics = [#tpu.dimension_semantics<parallel>, #tpu.dimension_semantics<arbitrary>], iteration_bounds = array<i64: 1, 1>, scalar_prefetch = 0 : i64, scratch_operands = 0 : i64, tpu.core_type = #tpu.core_type<tc>, window_params = [{pipeline_mode = #tpu.pipeline_mode<synchronous>, transform_indices = @transform_0, window_bounds = array<i64: 1, 128>}, {pipeline_mode = #tpu.pipeline_mode<synchronous>, transform_indices = @transform_1, window_bounds = array<i64: 8, 1>}, {transform_indices = @transform_2, window_bounds = array<i64: 128, 32>}, {transform_indices = @transform_3, window_bounds = array<i64: 8, 32>}]} {
    %c0_i32 = arith.constant 0 : i32
    %0 = arith.cmpi eq, %arg1, %c0_i32 : i32
    %1 = arith.extui %0 : i1 to i32
    %c0_i32_0 = arith.constant 0 : i32
    %2 = arith.cmpi ne, %1, %c0_i32_0 : i32
    scf.if %2 {
      %cst_10 = arith.constant 0.000000e+00 : f32
      %28 = vector.broadcast %cst_10 : f32 to vector<8x32xf32>
      %c0_11 = arith.constant 0 : index
      %c0_12 = arith.constant 0 : index
      %29 = vector.load %arg5[%c0_11, %c0_12] : memref<8x32xf32, #tpu.memory_space<vmem>>, vector<8x32xf32>
      tpu.vector_store %arg5[%c0_11, %c0_12], %28 {strides = array<i32>} : memref<8x32xf32, #tpu.memory_space<vmem>>, vector<8x32xf32>,
    } else {
    }
    %c0 = arith.constant 0 : index
    %c0_1 = arith.constant 0 : index
    %3 = vector.load %arg4[%c0, %c0_1] : memref<128x32xf32, #tpu.memory_space<vmem>>, vector<128x32xf32>
    %4 = tpu.iota {dimensions = array<i32: 0>} : vector<128x1xi32>
    %c128_i32 = arith.constant 128 : i32
    %5 = arith.muli %arg1, %c128_i32 : i32
    %6 = vector.broadcast %5 : i32 to vector<128x1xi32>
    %7 = arith.addi %4, %6 : vector<128x1xi32>
    %c100_i32 = arith.constant 100 : i32
    %8 = vector.broadcast %c100_i32 : i32 to vector<128x1xi32>
    %9 = arith.cmpi slt, %7, %8 : vector<128x1xi32>
    %cst = arith.constant 0.000000e+00 : f32
    %10 = vector.broadcast %cst : f32 to vector<128x32xf32>
    %11 = vector.shape_cast %9 : vector<128x1xi1> to vector<128x1xi1>
    %12 = vector.broadcast %11 : vector<128x1xi1> to vector<128x32xi1>
    %13 = arith.select %12, %3, %10 : vector<128x32xi1>, vector<128x32xf32>
    %14 = arith.index_cast %arg1 : i32 to index
    %c0_2 = arith.constant 0 : index
    %15 = vector.load %arg2[%14, %c0_2] : memref<1x128xi32, #tpu.memory_space<vmem>>, vector<1x128xi32>
    %16 = tpu.iota {dimensions = array<i32: 0>} : vector<8x128xi32>
    %17 = vector.broadcast %15 : vector<1x128xi32> to vector<8x128xi32>
    %18 = arith.cmpi eq, %16, %17 : vector<8x128xi32>
    %19 = arith.extui %18 : vector<8x128xi1> to vector<8x128xi32>
    %20 = arith.sitofp %19 : vector<8x128xi32> to vector<8x128xf32>
    %c0_3 = arith.constant 0 : index
    %c0_4 = arith.constant 0 : index
    %21 = vector.load %arg5[%c0_3, %c0_4] : memref<8x32xf32, #tpu.memory_space<vmem>>, vector<8x32xf32>
    %cst_5 = arith.constant dense<0.000000e+00> : vector<8x32xf32>
    %22 = tpu.matmul %20, %13, %cst_5 {dimension_numbers = #tpu.dot_dimension_numbers<[1], [0], [0], [1], [0, 0, 1, 1], [], []>} : vector<8x128xf32>, vector<128x32xf32>, vector<8x32xf32> -> vector<8x32xf32>
    %23 = arith.addf %21, %22 : vector<8x32xf32>
    %c0_6 = arith.constant 0 : index
    %c0_7 = arith.constant 0 : index
    %24 = vector.load %arg5[%c0_6, %c0_7] : memref<8x32xf32, #tpu.memory_space<vmem>>, vector<8x32xf32>
    tpu.vector_store %arg5[%c0_6, %c0_7], %23 {strides = array<i32>} : memref<8x32xf32, #tpu.memory_space<vmem>>, vector<8x32xf32>,
    %c0_i32_8 = arith.constant 0 : i32
    %25 = arith.cmpi eq, %arg1, %c0_i32_8 : i32
    %26 = arith.extui %25 : i1 to i32
    %c0_i32_9 = arith.constant 0 : i32
    %27 = arith.cmpi ne, %26, %c0_i32_9 : i32
    scf.if %27 {
      %c0_10 = arith.constant 0 : index
      %c0_11 = arith.constant 0 : index
      %28 = vector.load %arg5[%c0_10, %c0_11] : memref<8x32xf32, #tpu.memory_space<vmem>>, vector<8x32xf32>
      %c0_12 = arith.constant 0 : index
      %c0_13 = arith.constant 0 : index
      %29 = vector.load %arg3[%c0_12, %c0_13] : memref<8x1xf32, #tpu.memory_space<vmem>>, vector<8x1xf32>
      %30 = vector.broadcast %29 : vector<8x1xf32> to vector<8x32xf32>
      %31 = arith.mulf %28, %30 : vector<8x32xf32>
      %32 = arith.negf %31 : vector<8x32xf32>
      %33 = math.exp %32 : vector<8x32xf32>
      %cst_14 = arith.constant 1.000000e+00 : f32
      %34 = vector.broadcast %cst_14 : f32 to vector<8x32xf32>
      %35 = arith.addf %34, %33 : vector<8x32xf32>
      %36 = arith.divf %34, %35 : vector<8x32xf32>
      %c0_15 = arith.constant 0 : index
      %c0_16 = arith.constant 0 : index
      %37 = vector.load %arg5[%c0_15, %c0_16] : memref<8x32xf32, #tpu.memory_space<vmem>>, vector<8x32xf32>
      tpu.vector_store %arg5[%c0_15, %c0_16], %36 {strides = array<i32>} : memref<8x32xf32, #tpu.memory_space<vmem>>, vector<8x32xf32>,
    } else {
    }
    return
  }
  func.func @transform_0(%arg0: i32, %arg1: i32) -> (i32, i32) {
    %c0_i32 = arith.constant 0 : i32
    %c0_i32_0 = arith.constant 0 : i32
    %c0_i32_1 = arith.constant 0 : i32
    return %c0_i32, %c0_i32_0 : i32, i32
  }
  func.func @transform_1(%arg0: i32, %arg1: i32) -> (i32, i32) {
    %c0_i32 = arith.constant 0 : i32
    %c0_i32_0 = arith.constant 0 : i32
    %c0_i32_1 = arith.constant 0 : i32
    return %c0_i32, %c0_i32_0 : i32, i32
  }
  func.func @transform_2(%arg0: i32, %arg1: i32) -> (i32, i32) {
    %c0_i32 = arith.constant 0 : i32
    return %arg1, %arg0 : i32, i32
  }
  func.func @transform_3(%arg0: i32, %arg1: i32) -> (i32, i32) {
    %c0_i32 = arith.constant 0 : i32
    %c0_i32_0 = arith.constant 0 : i32
    return %c0_i32, %arg0 : i32, i32
  }
}

</mosaic_0001>

<llo_original>
// kernel: tpu_custom_call.1
$region0: #{tpu_custom_call.1}
  #allocation0 [shape = 'u32[]', space=smem, size = 0x4, offset = 0x4, fixed_abs, tag = 'smem constant byte address 0x4 - core index']
  #allocation1 [shape = 'u32[144,128]{1,0:T(1,128)}', space=vmem, size = 0x12000, scoped, tag = 'internal scratch']
  %s0 = inlined_call_operand.vmem [shape: s32[1,128], index: 0, kind: input, shape index: {}]
  %s1 = inlined_call_operand.vmem [shape: f32[8,1], index: 1, kind: input, shape index: {}]
  %s2 = inlined_call_operand.vmem [shape: f32[100,32], index: 2, kind: input, shape index: {}]
  %s3 = inlined_call_operand.hbm [shape: f32[8,32], index: 3, kind: output, shape index: {}]
  %s4 = sld [smem:[#allocation0]]
  $region30: #{tpu_custom_call.1} parent=0
    _
  %s6 = ssub.s32 1, %s4
  %s7 = scalar_select 0, %s6, %s4
  $region1: #{tpu_custom_call.1} parent=0
    #allocation2 [shape = 'u8[4096]{0}', space=vmem, size = 0x1000, scoped, tag = 'output window, operand 0, single buffered']
    #allocation3 [shape = 's32[1]{0}', space=sflag, size = 0x4, scoped, tag = 'scoped memory for tpu_custom_call.1']
    %8 = vsyncpa [#allocation3], 0
    // Predicated region
    $region2: #{tpu_custom_call.1} parent=1 // pred_check
      _
    $region3: #{tpu_custom_call.1} parent=1 // pred_check_branch
      %10 = sbr.rel (0) target = $region5
    $region4: #{tpu_custom_call.1} parent=1 // pred_region
      _
    $region5: #{tpu_custom_call.1} parent=1 // pred_fallthru
      _
    // Predicated region
    $region6: #{tpu_custom_call.1} parent=1 // pred_check
      _
    $region7: #{tpu_custom_call.1} parent=1 // pred_check_branch
      %12 = sbr.rel (0) target = $region9
    $region8: #{tpu_custom_call.1} parent=1 // pred_region
      _
    $region9: #{tpu_custom_call.1} parent=1 // pred_fallthru
      _
    // Predicated region
    $region10: #{tpu_custom_call.1} parent=1 // pred_check
      _
    $region11: #{tpu_custom_call.1} parent=1 // pred_check_branch
      %14 = sbr.rel (0) target = $region13
    $region12: #{tpu_custom_call.1} parent=1 // pred_region
      _
    $region13: #{tpu_custom_call.1} parent=1 // pred_fallthru
      _
    %p15 = scmp.eq.s32.totalorder 0, 0
    // Predicated region
    $region14: #{tpu_custom_call.1} parent=1 // pred_check
      %p16 = pneg %p15
    $region15: #{tpu_custom_call.1} parent=1 // pred_check_branch
      %18 = sbr.rel (%p16) target = $region17
    $region16: #{tpu_custom_call.1} parent=1 // pred_region
      %vm19 = vcmask 261120
      %20 = vst.msk [vmem:[#allocation2] sm:$0xff] %vm19, 0.0
    $region17: #{tpu_custom_call.1} parent=1 // pred_fallthru
      _
    %v21 = vld [vmem:[%s2] sm:$0xff]
    %v22 = vld [vmem:[%s2 + $0x8] sm:$0xff]
    %v23 = vld [vmem:[%s2 + $0x10] sm:$0xff]
    %v24 = vld [vmem:[%s2 + $0x18] sm:$0xff]
    %v25 = vld [vmem:[%s2 + $0x20] sm:$0xff]
    %v26 = vld [vmem:[%s2 + $0x28] sm:$0xff]
    %v27 = vld [vmem:[%s2 + $0x30] sm:$0xff]
    %v28 = vld [vmem:[%s2 + $0x38] sm:$0xff]
    %v29 = vld [vmem:[%s2 + $0x40] sm:$0xff]
    %v30 = vld [vmem:[%s2 + $0x48] sm:$0xff]
    %v31 = vld [vmem:[%s2 + $0x50] sm:$0xff]
    %v32 = vld [vmem:[%s2 + $0x58] sm:$0xff]
    %v33 = vld [vmem:[%s2 + $0x60] sm:$0xff]
    %v34 = vld [vmem:[%s2 + $0x68] sm:$0xff]
    %v35 = vld [vmem:[%s2 + $0x70] sm:$0xff]
    %v36 = vld [vmem:[%s2 + $0x78] sm:$0xff]
    %v37 = vlaneseq
    %v38 = vshrl.u32 %v37, 7
    %v39 = vadd.s32 %v38, 8
    %v40 = vadd.s32 %v38, 16
    %v41 = vadd.s32 %v38, 24
    %v42 = vadd.s32 %v38, 32
    %v43 = vadd.s32 %v38, 40
    %v44 = vadd.s32 %v38, 48
    %v45 = vadd.s32 %v38, 56
    %v46 = vadd.s32 %v38, 64
    %v47 = vadd.s32 %v38, 72
    %v48 = vadd.s32 %v38, 80
    %v49 = vadd.s32 %v38, 88
    %v50 = vadd.s32 %v38, 96
    %v51 = vadd.s32 %v38, 104
    %v52 = vadd.s32 %v38, 112
    %v53 = vadd.s32 %v38, 120
    %s54 = smul.u32 0, 128
    %v55 = vstv %s54
    %v56 = vadd.s32 %v38, %v55
    %v57 = vadd.s32 %v39, %v55
    %v58 = vadd.s32 %v40, %v55
    %v59 = vadd.s32 %v41, %v55
    %v60 = vadd.s32 %v42, %v55
    %v61 = vadd.s32 %v43, %v55
    %v62 = vadd.s32 %v44, %v55
    %v63 = vadd.s32 %v45, %v55
    %v64 = vadd.s32 %v46, %v55
    %v65 = vadd.s32 %v47, %v55
    %v66 = vadd.s32 %v48, %v55
    %v67 = vadd.s32 %v49, %v55
    %v68 = vadd.s32 %v50, %v55
    %v69 = vadd.s32 %v51, %v55
    %v70 = vadd.s32 %v52, %v55
    %v71 = vadd.s32 %v53, %v55
    %vm72 = vcmp.lt.s32.totalorder %v56, 100
    %vm73 = vcmp.lt.s32.totalorder %v57, 100
    %vm74 = vcmp.lt.s32.totalorder %v58, 100
    %vm75 = vcmp.lt.s32.totalorder %v59, 100
    %vm76 = vcmp.lt.s32.totalorder %v60, 100
    %vm77 = vcmp.lt.s32.totalorder %v61, 100
    %vm78 = vcmp.lt.s32.totalorder %v62, 100
    %vm79 = vcmp.lt.s32.totalorder %v63, 100
    %vm80 = vcmp.lt.s32.totalorder %v64, 100
    %vm81 = vcmp.lt.s32.totalorder %v65, 100
    %vm82 = vcmp.lt.s32.totalorder %v66, 100
    %vm83 = vcmp.lt.s32.totalorder %v67, 100
    %vm84 = vcmp.lt.s32.totalorder %v68, 100
    %vm85 = vcmp.lt.s32.totalorder %v69, 100
    %vm86 = vcmp.lt.s32.totalorder %v70, 100
    %vm87 = vcmp.lt.s32.totalorder %v71, 100
    %v88 = vsel %vm72, 1, 0
    %v89 = vsel %vm73, 1, 0
    %v90 = vsel %vm74, 1, 0
    %v91 = vsel %vm75, 1, 0
    %v92 = vsel %vm76, 1, 0
    %v93 = vsel %vm77, 1, 0
    %v94 = vsel %vm78, 1, 0
    %v95 = vsel %vm79, 1, 0
    %v96 = vsel %vm80, 1, 0
    %v97 = vsel %vm81, 1, 0
    %v98 = vsel %vm82, 1, 0
    %v99 = vsel %vm83, 1, 0
    %v100 = vsel %vm84, 1, 0
    %v101 = vsel %vm85, 1, 0
    %v102 = vsel %vm86, 1, 0
    %v103 = vsel %vm87, 1, 0
    %vm104 = vcmp.eq.s32.totalorder %v88, 1
    %vm105 = vcmp.eq.s32.totalorder %v89, 1
    %vm106 = vcmp.eq.s32.totalorder %v90, 1
    %vm107 = vcmp.eq.s32.totalorder %v91, 1
    %vm108 = vcmp.eq.s32.totalorder %v92, 1
    %vm109 = vcmp.eq.s32.totalorder %v93, 1
    %vm110 = vcmp.eq.s32.totalorder %v94, 1
    %vm111 = vcmp.eq.s32.totalorder %v95, 1
    %vm112 = vcmp.eq.s32.totalorder %v96, 1
    %vm113 = vcmp.eq.s32.totalorder %v97, 1
    %vm114 = vcmp.eq.s32.totalorder %v98, 1
    %vm115 = vcmp.eq.s32.totalorder %v99, 1
    %vm116 = vcmp.eq.s32.totalorder %v100, 1
    %vm117 = vcmp.eq.s32.totalorder %v101, 1
    %vm118 = vcmp.eq.s32.totalorder %v102, 1
    %vm119 = vcmp.eq.s32.totalorder %v103, 1
    %v120 = vsel %vm104, %v21, 0.0
    %v121 = vsel %vm105, %v22, 0.0
    %v122 = vsel %vm106, %v23, 0.0
    %v123 = vsel %vm107, %v24, 0.0
    %v124 = vsel %vm108, %v25, 0.0
    %v125 = vsel %vm109, %v26, 0.0
    %v126 = vsel %vm110, %v27, 0.0
    %v127 = vsel %vm111, %v28, 0.0
    %v128 = vsel %vm112, %v29, 0.0
    %v129 = vsel %vm113, %v30, 0.0
    %v130 = vsel %vm114, %v31, 0.0
    %v131 = vsel %vm115, %v32, 0.0
    %v132 = vsel %vm116, %v33, 0.0
    %v133 = vsel %vm117, %v34, 0.0
    %v134 = vsel %vm118, %v35, 0.0
    %v135 = vsel %vm119, %v36, 0.0
    %v136 = vld [vmem:[%s0] sm:$0x1]
    %v137 = vlaneseq
    %v138 = vshrl.u32 %v137, 7
    %v139 = vsub.s32 0, %v138
    %v140 = vrot.slane %v136, %v139
    %vm141 = vcmp.eq.s32.totalorder %v38, %v140
    %v142 = vsel %vm141, 1, 0
    %v143 = vcvt.s32.f32 %v142
    %v144 = vld [vmem:[#allocation2] sm:$0xff]
    %145 = vmatprep.subr.mxu0 0.0
    %146 = vmatpush1.msra.mxu0 %v120
    %147 = vmatprep.subr.mxu0 0.0
    %148 = vmatpush1.msra.mxu0 %v121
    %149 = vmatprep.subr.mxu0 0.0
    %150 = vmatpush1.msra.mxu0 %v122
    %151 = vmatprep.subr.mxu0 0.0
    %152 = vmatpush1.msra.mxu0 %v123
    %153 = vmatprep.subr.mxu0 0.0
    %154 = vmatpush1.msra.mxu0 %v124
    %155 = vmatprep.subr.mxu0 0.0
    %156 = vmatpush1.msra.mxu0 %v125
    %157 = vmatprep.subr.mxu0 0.0
    %158 = vmatpush1.msra.mxu0 %v126
    %159 = vmatprep.subr.mxu0 0.0
    %160 = vmatpush1.msra.mxu0 %v127
    %161 = vmatprep.subr.mxu0 0.0
    %162 = vmatpush1.msra.mxu0 %v128
    %163 = vmatprep.subr.mxu0 0.0
    %164 = vmatpush1.msra.mxu0 %v129
    %165 = vmatprep.subr.mxu0 0.0
    %166 = vmatpush1.msra.mxu0 %v130
    %167 = vmatprep.subr.mxu0 0.0
    %168 = vmatpush1.msra.mxu0 %v131
    %169 = vmatprep.subr.mxu0 0.0
    %170 = vmatpush1.msra.mxu0 %v132
    %171 = vmatprep.subr.mxu0 0.0
    %172 = vmatpush1.msra.mxu0 %v133
    %173 = vmatprep.subr.mxu0 0.0
    %174 = vmatpush1.msra.mxu0 %v134
    %175 = vmatprep.subr.mxu0 0.0
    %176 = vmatpush1.msra.mxu0 %v135
    %177 = vmatprep.subr.mxu0 0.0
    %178 = vmatpush1.msra.mxu0 0.0
    %179 = vmatprep.subr.mxu0 0.0
    %180 = vmatpush1.msra.mxu0 0.0
    %181 = vmatprep.subr.mxu0 0.0
    %182 = vmatpush1.msra.mxu0 0.0
    %183 = vmatprep.subr.mxu0 0.0
    %184 = vmatpush1.msra.mxu0 0.0
    %185 = vmatprep.subr.mxu0 0.0
    %186 = vmatpush1.msra.mxu0 0.0
    %187 = vmatprep.subr.mxu0 0.0
    %188 = vmatpush1.msra.mxu0 0.0
    %189 = vmatprep.subr.mxu0 0.0
    %190 = vmatpush1.msra.mxu0 0.0
    %191 = vmatprep.subr.mxu0 0.0
    %192 = vmatpush1.msra.mxu0 0.0
    %193 = vmatprep.subr.mxu0 0.0
    %194 = vmatpush1.msra.mxu0 0.0
    %195 = vmatprep.subr.mxu0 0.0
    %196 = vmatpush1.msra.mxu0 0.0
    %197 = vmatprep.subr.mxu0 0.0
    %198 = vmatpush1.msra.mxu0 0.0
    %199 = vmatprep.subr.mxu0 0.0
    %200 = vmatpush1.msra.mxu0 0.0
    %201 = vmatprep.subr.mxu0 0.0
    %202 = vmatpush1.msra.mxu0 0.0
    %203 = vmatprep.subr.mxu0 0.0
    %204 = vmatpush1.msra.mxu0 0.0
    %205 = vmatprep.subr.mxu0 0.0
    %206 = vmatpush1.msra.mxu0 0.0
    %207 = vmatprep.subr.mxu0 0.0
    %208 = vmatpush1.msra.mxu0 0.0
    %209 = vmatprep.mubr.f32.mxu0 0.0
    %210 = vmatmul.mubr.f32.gmra.mrb[0].mxu0 %v143
    %v211 = vpop.f32.mrb[0].mxu0
    %v212 = vadd.f32 0.0, %v211
    %v213 = vpop.f32.mrb[0].mxu0
    %214 = vdwg.mxu0
    %v215 = vadd.f32 %v144, %v212
    %vm216 = vcmask 261120
    %217 = vst.msk [vmem:[#allocation2] sm:$0xff] %vm216, %v215
    // Predicated region
    $region18: #{tpu_custom_call.1} parent=1 // pred_check
      %p218 = pneg %p15
    $region19: #{tpu_custom_call.1} parent=1 // pred_check_branch
      %220 = sbr.rel (%p218) target = $region21
    $region20: #{tpu_custom_call.1} parent=1 // pred_region
      %v221 = vld [vmem:[#allocation2] sm:$0xff]
      %v222 = vld [vmem:[%s1] sm:$0xff]
      %224 = vset.pattern.permute.xlu0 0
      %225 = vperm.xlu0 %224, %v222
      %v226 = vpop.permute.xlu0 %225
      %v228 = vmul.f32 %v221, %v226
      %v229 = vxor.u32 %v228, 2147483648
      %v230 = vmul.f32 %v229, 1.442695
      %v231 = vpow.pop %v230
      %v232 = vadd.f32 %v231, 1.0
      %v233 = vrcp.pop %v232
      %v234 = vmul.f32 1.0, %v233
      %235 = vst.msk [vmem:[#allocation2] sm:$0xff] %vm216, %v234
    $region21: #{tpu_custom_call.1} parent=1 // pred_fallthru
      _
    // Predicated region
    $region22: #{tpu_custom_call.1} parent=1 // pred_check
      _
    $region23: #{tpu_custom_call.1} parent=1 // pred_check_branch
      %237 = sbr.rel (0) target = $region25
    $region24: #{tpu_custom_call.1} parent=1 // pred_region
      %s239 = ssub.s32 128, 128
      %240 = vsyncadd [#allocation3], %s239
      %s242 = sshll.u32 [#allocation2], 4
      %s243 = int_to_ptr.vmem [resolvable:$true] %s242
      %245 = dma.vmem_to_hbm [thread:$0]  %s243, 128, %s3, [#allocation3]
    $region25: #{tpu_custom_call.1} parent=1 // pred_fallthru
      _
    // Predicated region
    $region26: #{tpu_custom_call.1} parent=1 // pred_check
      _
    $region27: #{tpu_custom_call.1} parent=1 // pred_check_branch
      %247 = sbr.rel (0) target = $region29
    $region28: #{tpu_custom_call.1} parent=1 // pred_region
      %248 = dma.done [#allocation3], 128
    $region29: #{tpu_custom_call.1} parent=1 // pred_fallthru
      _
    %249 = vsyncpa [#allocation3], 1

</llo_original>
